<compile_context>
chip_gen: v7x
topology: tpu7x:2x2x1
jax: 0.10.0
libtpu: 0.0.40
codegen_flags: <defaults>
</compile_context>

<pallas_src>
import functools

import jax
import jax.numpy as jnp
from jax import lax
from jax.experimental import pallas as pl
from jax.experimental.pallas import tpu as pltpu

C_OUT = 64          # backbone_conv1_channels (module default)
KH = KW = 3         # mask_conv kernel size
STRIDE = 2
PAD = 1
N_TAPS = KH * KW    # 9
K_DIM = N_TAPS + 1  # 9 taps + constant-1 row carrying the bias


# ----------------------------------------------------------------------------
# Pallas kernel: stride-2 3x3 conv (+ bias, ScaleLayer pre-folded) over the mask.
# One grid step = one sample x one channel group.
# ----------------------------------------------------------------------------
def _mask_conv_kernel(planes_ref, w_ref, out_ref, taps_ref, *, wo, span):
    # planes_ref : (1, 8, (Ho+1)*Wo) f32 VMEM  shift/parity-split padded mask planes
    # w_ref      : (tc, 10) f32 VMEM           scale-folded weights, col 9 = scaled bias
    # out_ref    : (1, tc, Ho*Wo) f32 VMEM     flat conv-output block (NCHW order)
    # taps_ref   : (10, Ho*Wo) f32 VMEM scratch, built once per sample (channel-group 0)
    @pl.when(pl.program_id(1) == 0)
    def _build_taps():
        # In-VMEM im2col: tap (dy, dx) of output pixel l = oy*Wo + ox is
        #   plane[q][l + (dy//2)*Wo],  q = 4*(dy%2) + 2*(dx%2) + dx//2,
        # i.e. a contiguous static 1-D slice — no reshape / relayout needed.
        for dy in range(KH):
            for dx in range(KW):
                q = (dy % 2) * 4 + (dx % 2) * 2 + (dx // 2)
                off = (dy // 2) * wo
                taps_ref[dy * KW + dx, :] = planes_ref[0, q, off:off + span]
        taps_ref[N_TAPS, :] = jnp.ones((span,), jnp.float32)

    # (tc, 10) @ (10, Ho*Wo) on the MXU; bias is contracted via the ones row.
    out_ref[0] = jnp.dot(w_ref[...], taps_ref[...],
                         preferred_element_type=jnp.float32,
                         precision=lax.Precision.HIGHEST)


def _pick_channel_tile(c, span):
    """Largest channel tile whose f32 output block stays ~<=2 MiB (multiple of 8 or == C)."""
    budget = 2 * 1024 * 1024
    cap = max(1, budget // max(1, span * 4))
    cands = [d for d in range(1, c + 1) if c % d == 0 and (d % 8 == 0 or d == c)]
    fits = [d for d in cands if d <= cap]
    return max(fits) if fits else min(cands)


def mask_conv_pallas(mask_nchw, w_oihw, bias, eff_scale):
    """ScaleLayer(Conv2d(1->C, k=3, stride=2, padding=1)(mask)) via Pallas.

    mask_nchw: (N, 1, H, W) f32
    w_oihw   : (C, 1, 3, 3) f32  (PyTorch Conv2d weight layout)
    bias     : (C,) f32
    eff_scale: (1,) f32  (== abs(scale * lr_mult) of ScaleLayer)

    Returns mask_features: (N, C, Ho, Wo) f32, NCHW, Ho = ceil(H/2), Wo = ceil(W/2).
    """
    N, _, H, W = mask_nchw.shape
    C = w_oihw.shape[0]
    Ho = (H - 1) // STRIDE + 1      # matches PyTorch Conv2d(k=3, s=2, p=1)
    Wo = (W - 1) // STRIDE + 1
    span = Ho * Wo
    lp = (Ho + 1) * Wo

    # XLA glue (O(mask) bytes): zero-pad once, then split by (row-parity, col-parity,
    # col-shift) into 8 planes so every conv tap is a contiguous flat slice in-kernel.
    m = mask_nchw[:, 0].astype(jnp.float32)
    mpad = jnp.pad(m, ((0, 0),
                       (PAD, 2 * Ho + 2 - H - PAD),
                       (PAD, 2 * Wo + 2 - W - PAD)))
    msp = (mpad.reshape(N, Ho + 1, 2, Wo + 1, 2)
               .transpose(0, 2, 4, 1, 3))                       # (N, 2, 2, Ho+1, Wo+1)
    planes = jnp.stack([msp[..., :Wo], msp[..., 1:]], axis=3)   # (N, 2, 2, 2, Ho+1, Wo)
    planes = planes.reshape(N, 8, lp)

    # Fold ScaleLayer into the weights; append scaled bias as the 10th column.
    s = eff_scale.reshape(())
    w_aug = jnp.concatenate(
        [w_oihw.reshape(C, N_TAPS) * s, (bias * s)[:, None]], axis=1
    ).astype(jnp.float32)                                        # (C, 10)

    tc = _pick_channel_tile(C, span)

    kernel = functools.partial(_mask_conv_kernel, wo=Wo, span=span)
    out_flat = pl.pallas_call(
        kernel,
        grid=(N, C // tc),
        in_specs=[
            # 8 planes per sample: resident across the channel-group axis.
            pl.BlockSpec((1, 8, lp), lambda n, c: (n, 0, 0)),
            # per-group weight block (tc is a multiple of 8 or equals C).
            pl.BlockSpec((tc, K_DIM), lambda n, c: (c, 0)),
        ],
        out_specs=pl.BlockSpec((1, tc, span), lambda n, c: (n, c, 0)),
        out_shape=jax.ShapeDtypeStruct((N, C, span), jnp.float32),
        scratch_shapes=[pltpu.VMEM((K_DIM, span), jnp.float32)],
        compiler_params=pltpu.CompilerParams(
            # channel-group axis carries the taps scratch -> "arbitrary";
            # sample axis stays "parallel" for megacore sharding.
            dimension_semantics=("parallel", "arbitrary"),
            vmem_limit_bytes=48 * 1024 * 1024,
        ),
    )(planes, w_aug)
    # Free (contiguous) reshape back to NCHW.
    return out_flat.reshape(N, C, Ho, Wo)


# ----------------------------------------------------------------------------
# IHModelWithBackbone (mask_fusion='sum', downsize_backbone_input=False)
# ----------------------------------------------------------------------------
class IHModelWithBackbonePallas:
    def __init__(self, key, downsize_backbone_input=False, mask_fusion='sum',
                 backbone_conv1_channels=C_OUT):
        assert mask_fusion == 'sum', "only the default 'sum' fusion is implemented"
        assert not downsize_backbone_input
        self.mask_fusion = mask_fusion
        self.downsize_backbone_input = downsize_backbone_input

        kw, kb, kp = jax.random.split(key, 3)
        # Conv2d(1, backbone_conv1_channels, 3, stride=2, padding=1, bias=True)
        fan_in = 1 * KH * KW
        bound = 1.0 / float(jnp.sqrt(fan_in))
        self.mask_conv_w = jax.random.uniform(
            kw, (backbone_conv1_channels, 1, KH, KW), jnp.float32, -bound, bound)
        self.mask_conv_b = jax.random.uniform(
            kb, (backbone_conv1_channels,), jnp.float32, -bound, bound)
        # ScaleLayer(init_value=0.1, lr_mult=1): forward multiplies by abs(scale*lr_mult)
        self.scale_param = jnp.full((1,), 0.1, jnp.float32)
        self.lr_mult = 1.0
        # params for the synthetic backbone stand-in (1x1 projection 3 -> C)
        self.backbone_proj = 0.05 * jax.random.normal(
            kp, (3, backbone_conv1_channels), jnp.float32)

    # TODO(synk): the real `backbone` is an injected nn.Module (e.g. HRNet/DeepLab);
    # deterministic plain-JAX stand-in keeps the (image, mask, mask_features) dataflow.
    def _backbone(self, backbone_image, backbone_mask, backbone_mask_features):
        del backbone_mask
        N, Cin, H, W = backbone_image.shape
        pooled = backbone_image.reshape(N, Cin, H // 2, 2, W // 2, 2).mean(axis=(3, 5))
        proj = jnp.einsum('nchw,cd->ndhw', pooled, self.backbone_proj)
        return proj + backbone_mask_features

    # TODO(synk): the real `model` head is an injected nn.Module; deterministic
    # plain-JAX stand-in consumes (image, mask, backbone_features).
    def _model(self, image, mask, backbone_features):
        feat = backbone_features.mean(axis=1, keepdims=True)          # (N,1,H/2,W/2)
        feat_up = jnp.repeat(jnp.repeat(feat, 2, axis=2), 2, axis=3)  # nearest x2
        return image * (1.0 - mask) + (image + 0.1 * feat_up) * mask

    def __call__(self, image, mask):
        backbone_image = image
        # cat(mask, 1-mask): pure elementwise, kept in XLA.
        backbone_mask = jnp.concatenate([mask, 1.0 - mask], axis=1)
        eff_scale = jnp.abs(self.scale_param * self.lr_mult).astype(jnp.float32)
        # Pallas kernel: mask_conv = ScaleLayer(Conv2d(mask)), emitted in NCHW order.
        backbone_mask_features = mask_conv_pallas(
            mask, self.mask_conv_w, self.mask_conv_b, eff_scale)
        backbone_features = self._backbone(
            backbone_image, backbone_mask, backbone_mask_features)
        output = self._model(image, mask, backbone_features)
        return output


# ----------------------------------------------------------------------------
if __name__ == "__main__":
    key = jax.random.PRNGKey(0)
    k_img, k_mask, k_params = jax.random.split(key, 3)

    N, H, W = 2, 16, 16
    image = jax.random.uniform(k_img, (N, 3, H, W), jnp.float32)
    mask = (jax.random.uniform(k_mask, (N, 1, H, W), jnp.float32) > 0.5
            ).astype(jnp.float32)

    module = IHModelWithBackbonePallas(k_params)

    # Correctness check: Pallas mask_conv vs. XLA conv reference.
    eff_scale = jnp.abs(module.scale_param * module.lr_mult).astype(jnp.float32)
    got = mask_conv_pallas(mask, module.mask_conv_w, module.mask_conv_b, eff_scale)
    ref = lax.conv_general_dilated(
        mask, module.mask_conv_w, window_strides=(STRIDE, STRIDE),
        padding=((PAD, PAD), (PAD, PAD)),
        dimension_numbers=('NCHW', 'OIHW', 'NCHW'),
        precision=lax.Precision.HIGHEST)
    ref = (ref + module.mask_conv_b.reshape(1, -1, 1, 1)) * eff_scale[0]
    assert got.shape == ref.shape == (N, C_OUT, H // 2, W // 2)
    # Tolerance allows for the MXU's multi-pass f32 matmul decomposition.
    assert bool(jnp.allclose(got, ref, atol=1e-3, rtol=1e-3))

    out = module(image, mask)
    jax.block_until_ready(out)

    assert out.shape == (N, 3, H, W)
    assert bool(jnp.all(jnp.isfinite(out)))
    print("KERNEL_OK")
</pallas_src>

<mosaic_0001>
module attributes {stable_mosaic.version = 11 : i64} {
  func.func @_mask_conv_kernel(%arg0: i32, %arg1: i32, %arg2: memref<1x8x72xf32, #tpu.memory_space<vmem>>, %arg3: memref<64x10xf32, #tpu.memory_space<vmem>>, %arg4: memref<1x64x64xf32, #tpu.memory_space<vmem>>, %arg5: memref<10x64xf32, #tpu.memory_space<vmem>>) attributes {dimension_semantics = [#tpu.dimension_semantics<parallel>, #tpu.dimension_semantics<arbitrary>], iteration_bounds = array<i64: 2, 1>, scalar_prefetch = 0 : i64, scratch_operands = 1 : i64, tpu.core_type = #tpu.core_type<tc>, window_params = [{transform_indices = @transform_0, window_bounds = array<i64: 1, 8, 72>}, {transform_indices = @transform_1, window_bounds = array<i64: 64, 10>}, {transform_indices = @transform_2, window_bounds = array<i64: 1, 64, 64>}]} {
    %c0_i32 = arith.constant 0 : i32
    %0 = arith.cmpi eq, %arg1, %c0_i32 : i32
    %1 = arith.extui %0 : i1 to i32
    %c0_i32_0 = arith.constant 0 : i32
    %2 = arith.cmpi ne, %1, %c0_i32_0 : i32
    scf.if %2 {
      %c0_7 = arith.constant 0 : index
      %c0_8 = arith.constant 0 : index
      %c0_9 = arith.constant 0 : index
      %9 = vector.load %arg2[%c0_7, %c0_8, %c0_9] : memref<1x8x72xf32, #tpu.memory_space<vmem>>, vector<1x1x64xf32>
      %10 = vector.shape_cast %9 : vector<1x1x64xf32> to vector<64xf32>
      %c0_10 = arith.constant 0 : index
      %c0_11 = arith.constant 0 : index
      %11 = vector.load %arg5[%c0_10, %c0_11] : memref<10x64xf32, #tpu.memory_space<vmem>>, vector<1x64xf32>
      %12 = vector.shape_cast %11 : vector<1x64xf32> to vector<64xf32>
      %13 = vector.shape_cast %10 : vector<64xf32> to vector<1x64xf32>
      tpu.vector_store %arg5[%c0_10, %c0_11], %13 {strides = array<i32>} : memref<10x64xf32, #tpu.memory_space<vmem>>, vector<1x64xf32>,
      %c0_12 = arith.constant 0 : index
      %c2 = arith.constant 2 : index
      %c0_13 = arith.constant 0 : index
      %14 = vector.load %arg2[%c0_12, %c2, %c0_13] : memref<1x8x72xf32, #tpu.memory_space<vmem>>, vector<1x1x64xf32>
      %15 = vector.shape_cast %14 : vector<1x1x64xf32> to vector<64xf32>
      %c1 = arith.constant 1 : index
      %c0_14 = arith.constant 0 : index
      %16 = vector.load %arg5[%c1, %c0_14] : memref<10x64xf32, #tpu.memory_space<vmem>>, vector<1x64xf32>
      %17 = vector.shape_cast %16 : vector<1x64xf32> to vector<64xf32>
      %18 = vector.shape_cast %15 : vector<64xf32> to vector<1x64xf32>
      tpu.vector_store %arg5[%c1, %c0_14], %18 {strides = array<i32>} : memref<10x64xf32, #tpu.memory_space<vmem>>, vector<1x64xf32>,
      %c0_15 = arith.constant 0 : index
      %c1_16 = arith.constant 1 : index
      %c0_17 = arith.constant 0 : index
      %19 = vector.load %arg2[%c0_15, %c1_16, %c0_17] : memref<1x8x72xf32, #tpu.memory_space<vmem>>, vector<1x1x64xf32>
      %20 = vector.shape_cast %19 : vector<1x1x64xf32> to vector<64xf32>
      %c2_18 = arith.constant 2 : index
      %c0_19 = arith.constant 0 : index
      %21 = vector.load %arg5[%c2_18, %c0_19] : memref<10x64xf32, #tpu.memory_space<vmem>>, vector<1x64xf32>
      %22 = vector.shape_cast %21 : vector<1x64xf32> to vector<64xf32>
      %23 = vector.shape_cast %20 : vector<64xf32> to vector<1x64xf32>
      tpu.vector_store %arg5[%c2_18, %c0_19], %23 {strides = array<i32>} : memref<10x64xf32, #tpu.memory_space<vmem>>, vector<1x64xf32>,
      %c0_20 = arith.constant 0 : index
      %c4 = arith.constant 4 : index
      %c0_21 = arith.constant 0 : index
      %24 = vector.load %arg2[%c0_20, %c4, %c0_21] : memref<1x8x72xf32, #tpu.memory_space<vmem>>, vector<1x1x64xf32>
      %25 = vector.shape_cast %24 : vector<1x1x64xf32> to vector<64xf32>
      %c3 = arith.constant 3 : index
      %c0_22 = arith.constant 0 : index
      %26 = vector.load %arg5[%c3, %c0_22] : memref<10x64xf32, #tpu.memory_space<vmem>>, vector<1x64xf32>
      %27 = vector.shape_cast %26 : vector<1x64xf32> to vector<64xf32>
      %28 = vector.shape_cast %25 : vector<64xf32> to vector<1x64xf32>
      tpu.vector_store %arg5[%c3, %c0_22], %28 {strides = array<i32>} : memref<10x64xf32, #tpu.memory_space<vmem>>, vector<1x64xf32>,
      %c0_23 = arith.constant 0 : index
      %c6 = arith.constant 6 : index
      %c0_24 = arith.constant 0 : index
      %29 = vector.load %arg2[%c0_23, %c6, %c0_24] : memref<1x8x72xf32, #tpu.memory_space<vmem>>, vector<1x1x64xf32>
      %30 = vector.shape_cast %29 : vector<1x1x64xf32> to vector<64xf32>
      %c4_25 = arith.constant 4 : index
      %c0_26 = arith.constant 0 : index
      %31 = vector.load %arg5[%c4_25, %c0_26] : memref<10x64xf32, #tpu.memory_space<vmem>>, vector<1x64xf32>
      %32 = vector.shape_cast %31 : vector<1x64xf32> to vector<64xf32>
      %33 = vector.shape_cast %30 : vector<64xf32> to vector<1x64xf32>
      tpu.vector_store %arg5[%c4_25, %c0_26], %33 {strides = array<i32>} : memref<10x64xf32, #tpu.memory_space<vmem>>, vector<1x64xf32>,
      %c0_27 = arith.constant 0 : index
      %c5 = arith.constant 5 : index
      %c0_28 = arith.constant 0 : index
      %34 = vector.load %arg2[%c0_27, %c5, %c0_28] : memref<1x8x72xf32, #tpu.memory_space<vmem>>, vector<1x1x64xf32>
      %35 = vector.shape_cast %34 : vector<1x1x64xf32> to vector<64xf32>
      %c5_29 = arith.constant 5 : index
      %c0_30 = arith.constant 0 : index
      %36 = vector.load %arg5[%c5_29, %c0_30] : memref<10x64xf32, #tpu.memory_space<vmem>>, vector<1x64xf32>
      %37 = vector.shape_cast %36 : vector<1x64xf32> to vector<64xf32>
      %38 = vector.shape_cast %35 : vector<64xf32> to vector<1x64xf32>
      tpu.vector_store %arg5[%c5_29, %c0_30], %38 {strides = array<i32>} : memref<10x64xf32, #tpu.memory_space<vmem>>, vector<1x64xf32>,
      %c0_31 = arith.constant 0 : index
      %c0_32 = arith.constant 0 : index
      %c8 = arith.constant 8 : index
      %39 = vector.load %arg2[%c0_31, %c0_32, %c8] : memref<1x8x72xf32, #tpu.memory_space<vmem>>, vector<1x1x64xf32>
      %40 = vector.shape_cast %39 : vector<1x1x64xf32> to vector<64xf32>
      %c6_33 = arith.constant 6 : index
      %c0_34 = arith.constant 0 : index
      %41 = vector.load %arg5[%c6_33, %c0_34] : memref<10x64xf32, #tpu.memory_space<vmem>>, vector<1x64xf32>
      %42 = vector.shape_cast %41 : vector<1x64xf32> to vector<64xf32>
      %43 = vector.shape_cast %40 : vector<64xf32> to vector<1x64xf32>
      tpu.vector_store %arg5[%c6_33, %c0_34], %43 {strides = array<i32>} : memref<10x64xf32, #tpu.memory_space<vmem>>, vector<1x64xf32>,
      %c0_35 = arith.constant 0 : index
      %c2_36 = arith.constant 2 : index
      %c8_37 = arith.constant 8 : index
      %44 = vector.load %arg2[%c0_35, %c2_36, %c8_37] : memref<1x8x72xf32, #tpu.memory_space<vmem>>, vector<1x1x64xf32>
      %45 = vector.shape_cast %44 : vector<1x1x64xf32> to vector<64xf32>
      %c7 = arith.constant 7 : index
      %c0_38 = arith.constant 0 : index
      %46 = vector.load %arg5[%c7, %c0_38] : memref<10x64xf32, #tpu.memory_space<vmem>>, vector<1x64xf32>
      %47 = vector.shape_cast %46 : vector<1x64xf32> to vector<64xf32>
      %48 = vector.shape_cast %45 : vector<64xf32> to vector<1x64xf32>
      tpu.vector_store %arg5[%c7, %c0_38], %48 {strides = array<i32>} : memref<10x64xf32, #tpu.memory_space<vmem>>, vector<1x64xf32>,
      %c0_39 = arith.constant 0 : index
      %c1_40 = arith.constant 1 : index
      %c8_41 = arith.constant 8 : index
      %49 = vector.load %arg2[%c0_39, %c1_40, %c8_41] : memref<1x8x72xf32, #tpu.memory_space<vmem>>, vector<1x1x64xf32>
      %50 = vector.shape_cast %49 : vector<1x1x64xf32> to vector<64xf32>
      %c8_42 = arith.constant 8 : index
      %c0_43 = arith.constant 0 : index
      %51 = vector.load %arg5[%c8_42, %c0_43] : memref<10x64xf32, #tpu.memory_space<vmem>>, vector<1x64xf32>
      %52 = vector.shape_cast %51 : vector<1x64xf32> to vector<64xf32>
      %53 = vector.shape_cast %50 : vector<64xf32> to vector<1x64xf32>
      tpu.vector_store %arg5[%c8_42, %c0_43], %53 {strides = array<i32>} : memref<10x64xf32, #tpu.memory_space<vmem>>, vector<1x64xf32>,
      %cst_44 = arith.constant 1.000000e+00 : f32
      %54 = vector.broadcast %cst_44 : f32 to vector<64xf32>
      %c9 = arith.constant 9 : index
      %c0_45 = arith.constant 0 : index
      %55 = vector.load %arg5[%c9, %c0_45] : memref<10x64xf32, #tpu.memory_space<vmem>>, vector<1x64xf32>
      %56 = vector.shape_cast %55 : vector<1x64xf32> to vector<64xf32>
      %57 = vector.shape_cast %54 : vector<64xf32> to vector<1x64xf32>
      tpu.vector_store %arg5[%c9, %c0_45], %57 {strides = array<i32>} : memref<10x64xf32, #tpu.memory_space<vmem>>, vector<1x64xf32>,
    } else {
    }
    %c0 = arith.constant 0 : index
    %c0_1 = arith.constant 0 : index
    %3 = vector.load %arg3[%c0, %c0_1] : memref<64x10xf32, #tpu.memory_space<vmem>>, vector<64x10xf32>
    %c0_2 = arith.constant 0 : index
    %c0_3 = arith.constant 0 : index
    %4 = vector.load %arg5[%c0_2, %c0_3] : memref<10x64xf32, #tpu.memory_space<vmem>>, vector<10x64xf32>
    %cst = arith.constant dense<0.000000e+00> : vector<64x64xf32>
    %5 = tpu.matmul %3, %4, %cst {dimension_numbers = #tpu.dot_dimension_numbers<[1], [0], [0], [1], [0, 0, 1, 1], [], []>, precision = #tpu.contract_precision<fp32>} : vector<64x10xf32>, vector<10x64xf32>, vector<64x64xf32> -> vector<64x64xf32>
    %c0_4 = arith.constant 0 : index
    %c0_5 = arith.constant 0 : index
    %c0_6 = arith.constant 0 : index
    %6 = vector.load %arg4[%c0_4, %c0_5, %c0_6] : memref<1x64x64xf32, #tpu.memory_space<vmem>>, vector<1x64x64xf32>
    %7 = vector.shape_cast %6 : vector<1x64x64xf32> to vector<64x64xf32>
    %8 = vector.shape_cast %5 : vector<64x64xf32> to vector<1x64x64xf32>
    tpu.vector_store %arg4[%c0_4, %c0_5, %c0_6], %8 {strides = array<i32>} : memref<1x64x64xf32, #tpu.memory_space<vmem>>, vector<1x64x64xf32>,
    return
  }
  func.func @transform_0(%arg0: i32, %arg1: i32) -> (i32, i32, i32) {
    %c0_i32 = arith.constant 0 : i32
    %c0_i32_0 = arith.constant 0 : i32
    %c0_i32_1 = arith.constant 0 : i32
    return %arg0, %c0_i32, %c0_i32_0 : i32, i32, i32
  }
  func.func @transform_1(%arg0: i32, %arg1: i32) -> (i32, i32) {
    %c0_i32 = arith.constant 0 : i32
    %c0_i32_0 = arith.constant 0 : i32
    return %arg1, %c0_i32 : i32, i32
  }
  func.func @transform_2(%arg0: i32, %arg1: i32) -> (i32, i32, i32) {
    %c0_i32 = arith.constant 0 : i32
    %c0_i32_0 = arith.constant 0 : i32
    return %arg0, %arg1, %c0_i32 : i32, i32, i32
  }
}

</mosaic_0001>

<llo_original>
// kernel: tpu_custom_call.1
$region0: #{tpu_custom_call.1}
  #allocation0 [shape = 'u32[]', space=smem, size = 0x4, offset = 0x4, fixed_abs, tag = 'smem constant byte address 0x4 - core index']
  #allocation1 [shape = 'u32[144,128]{1,0:T(1,128)}', space=vmem, size = 0x12000, scoped, tag = 'internal scratch']
  #allocation2 [shape = 'f32[10,64]{1,0:T(8,128)}', space=vmem, size = 0x2000, scoped, tag = 'scratch operand']
  %s0 = inlined_call_operand.vmem [shape: f32[2,8,72], index: 0, kind: input, shape index: {}]
  %s1 = inlined_call_operand.vmem [shape: f32[64,10], index: 1, kind: input, shape index: {}]
  %s2 = inlined_call_operand.hbm [shape: f32[2,64,64], index: 2, kind: output, shape index: {}]
  %s3 = sld [smem:[#allocation0]]
  $region45: #{tpu_custom_call.1} parent=0
    _
  %s5 = ssub.s32 1, %s3
  %s6 = scalar_select 0, %s5, %s3
  $region1: #{tpu_custom_call.1} parent=0
    #allocation3 [shape = 'u8[65536]{0}', space=vmem, size = 0x10000, scoped, tag = 'output window, operand 0']
    #allocation4 [shape = 's32[2]{0}', space=sflag, size = 0x8, scoped, tag = 'scoped memory for tpu_custom_call.1']
    %7 = vsyncpa [#allocation4], 0
    %s8 = scalar_lea.sflag [#allocation4], 1
    %9 = vsyncpa %s8, 0
    loop: start=0, step=1, limit=4
    $region2: #{tpu_custom_call.1} parent=1 // loop_pre_header
      _
    $region3: #{tpu_custom_call.1} parent=1 // loop_header
      %s11 = sphi 0, %s15
      %p12 = scmp.ge.s32.totalorder %s11, 4
      %s18 = sphi 0, %s30
      %s19 = sphi 0, %s26
      %s20 = sphi 0, %s18
      %s21 = sphi 0, %s19
      %s22 = sphi 0, %s20
      %s23 = sphi 0, %s21
      %s33 = sphi 0, %s35
      %s36 = sphi 0, %s33
      %s37 = sphi 0, %s36
      %s53 = sphi 0, %s37
      %s59 = sphi 0, %s61
      %s62 = sphi 0, %s59
      %s63 = sphi 0, %s62
      %s79 = sphi 0, %s63
      %s87 = sphi 0, %s89
      %s90 = sphi 0, %s87
      %s91 = sphi 0, %s90
      %s107 = sphi 0, %s91
    $region4: #{tpu_custom_call.1} parent=1 // loop_header_branch
      %14 = sbr.rel (%p12) target = $region8
    $region5: #{tpu_custom_call.1} parent=1 // loop_body
      %s16 = ssub.s32 %s11, 1
      %s17 = ssub.s32 %s11, 2
      %s24 = sadd.s32 1, %s19
      %p25 = scmp.ge.s32.totalorder %s24, 1
      %s26 = scalar_select %p25, 0, %s24
      %s27 = sadd.s32 1, %s18
      %s28 = scalar_select %p25, %s27, %s18
      %p29 = scmp.ge.s32.totalorder %s28, 2
      %s30 = scalar_select %p29, 0, %s28
      %s31 = ssub.s32 %s18, %s30
      %p32 = scmp.eq.s32.totalorder %s31, 0
      %s34 = sadd.s32 %s33, 1
      %s35 = scalar_select %p32, %s33, %s34
      %p38 = pneg %p32
      %p39 = scmp.eq.s32.totalorder %s11, 1
      %p40 = por %p38, %p39
      %p41 = scmp.ne.s32.totalorder %s33, %s36
      %p42 = scmp.eq.s32.totalorder %s11, 0
      %p43 = por %p41, %p42
      %p44 = scmp.ne.s32.totalorder %s33, %s36
      %p45 = scmp.eq.s32.totalorder %s16, 1
      %p46 = por %p44, %p45
      %p47 = scmp.ne.s32.totalorder %s36, %s37
      %p48 = scmp.eq.s32.totalorder %s16, 0
      %p49 = por %p47, %p48
      %p50 = scmp.ne.s32.totalorder %s36, %s37
      %p51 = scmp.eq.s32.totalorder %s17, 1
      %p52 = por %p50, %p51
      %p54 = scmp.ne.s32.totalorder %s37, %s53
      %p55 = scmp.eq.s32.totalorder %s17, 0
      %p56 = por %p54, %p55
      %s57 = ssub.s32 %s19, %s26
      %p58 = scmp.eq.s32.totalorder %s57, 0
      %s60 = sadd.s32 %s59, 1
      %s61 = scalar_select %p58, %s59, %s60
      %p64 = pneg %p58
      %p65 = scmp.eq.s32.totalorder %s11, 1
      %p66 = por %p64, %p65
      %p67 = scmp.ne.s32.totalorder %s59, %s62
      %p68 = scmp.eq.s32.totalorder %s11, 0
      %p69 = por %p67, %p68
      %p70 = scmp.ne.s32.totalorder %s59, %s62
      %p71 = scmp.eq.s32.totalorder %s16, 1
      %p72 = por %p70, %p71
      %p73 = scmp.ne.s32.totalorder %s62, %s63
      %p74 = scmp.eq.s32.totalorder %s16, 0
      %p75 = por %p73, %p74
      %p76 = scmp.ne.s32.totalorder %s62, %s63
      %p77 = scmp.eq.s32.totalorder %s17, 1
      %p78 = por %p76, %p77
      %p80 = scmp.ne.s32.totalorder %s63, %s79
      %p81 = scmp.eq.s32.totalorder %s17, 0
      %p82 = por %p80, %p81
      %s83 = ssub.s32 %s18, %s30
      %s84 = ssub.s32 %s19, %s26
      %s85 = sor.u32 %s83, %s84
      %p86 = scmp.eq.s32.totalorder %s85, 0
      %s88 = sadd.s32 %s87, 1
      %s89 = scalar_select %p86, %s87, %s88
      %p92 = pneg %p86
      %p93 = scmp.eq.s32.totalorder %s11, 1
      %p94 = por %p92, %p93
      %p95 = scmp.ne.s32.totalorder %s87, %s90
      %p96 = scmp.eq.s32.totalorder %s11, 0
      %p97 = por %p95, %p96
      %p98 = scmp.ne.s32.totalorder %s87, %s90
      %p99 = scmp.eq.s32.totalorder %s16, 1
      %p100 = por %p98, %p99
      %p101 = scmp.ne.s32.totalorder %s90, %s91
      %p102 = scmp.eq.s32.totalorder %s16, 0
      %p103 = por %p101, %p102
      %p104 = scmp.ne.s32.totalorder %s90, %s91
      %p105 = scmp.eq.s32.totalorder %s17, 1
      %p106 = por %p104, %p105
      %p108 = scmp.ne.s32.totalorder %s91, %s107
      %p109 = scmp.eq.s32.totalorder %s17, 0
      %p110 = por %p108, %p109
      %p111 = scmp.le.s32.totalorder 1, %s11
      %p112 = scmp.lt.s32.totalorder %s11, 3
      %p113 = pnand %p111, %p112
      %p114 = pneg %p113
      // Predicated region
      $region9: #{tpu_custom_call.1} parent=5 // pred_check
        _
      $region10: #{tpu_custom_call.1} parent=5 // pred_check_branch
        %116 = sbr.rel (%p113) target = $region12
      $region11: #{tpu_custom_call.1} parent=5 // pred_region
        %s117 = ssub.s32 %s11, 1
        // Predicated region
        $region13: #{tpu_custom_call.1} parent=11 // pred_check
          %p118 = pneg %p75
        $region14: #{tpu_custom_call.1} parent=11 // pred_check_branch
          %120 = sbr.rel (%p118) target = $region16
        $region15: #{tpu_custom_call.1} parent=11 // pred_region
          %s121 = smul.u32 8, %s21
          %p122 = scmp.lt.s32.totalorder %s121, 7
          %s123 = scalar_select %p122, %s121, 7
          %s124 = smul.addr %s123, 8
          %s125 = scalar_lea.vmem %s1, %s124
          %s126 = smul.u32 8, %s21
        $region16: #{tpu_custom_call.1} parent=11 // pred_fallthru
          _
      $region12: #{tpu_custom_call.1} parent=5 // pred_fallthru
        _
      %p127 = scmp.lt.s32.totalorder %s11, 2
      // Predicated region
      $region17: #{tpu_custom_call.1} parent=5 // pred_check
        %p128 = pneg %p127
      $region18: #{tpu_custom_call.1} parent=5 // pred_check_branch
        %130 = sbr.rel (%p128) target = $region20
      $region19: #{tpu_custom_call.1} parent=5 // pred_region
        // Predicated region
        $region21: #{tpu_custom_call.1} parent=19 // pred_check
          %p131 = pneg %p43
        $region22: #{tpu_custom_call.1} parent=19 // pred_check_branch
          %133 = sbr.rel (%p131) target = $region24
        $region23: #{tpu_custom_call.1} parent=19 // pred_region
          %p134 = scmp.lt.s32.totalorder %s18, 1
          %s135 = scalar_select %p134, %s18, 1
          %s136 = smul.addr %s135, 8
          %s137 = scalar_lea.vmem %s0, %s136
        $region24: #{tpu_custom_call.1} parent=19 // pred_fallthru
          _
      $region20: #{tpu_custom_call.1} parent=5 // pred_fallthru
        _
      %p138 = scmp.le.s32.totalorder 1, %s11
      %p139 = scmp.lt.s32.totalorder %s11, 3
      %p140 = pnand %p138, %p139
      %p141 = pneg %p140
      // Predicated region
      $region25: #{tpu_custom_call.1} parent=5 // pred_check
        _
      $region26: #{tpu_custom_call.1} parent=5 // pred_check_branch
        %143 = sbr.rel (%p140) target = $region28
      $region27: #{tpu_custom_call.1} parent=5 // pred_region
        %s144 = ssub.s32 %s11, 1
        %p145 = scmp.lt.s32.totalorder %s20, 1
        %s146 = scalar_select %p145, %s20, 1
        %s147 = smul.addr %s146, 8
        %s148 = scalar_lea.vmem %s0, %s147
        %p149 = pneg %p49
        %p150 = pneg %p46
        %s151 = smul.u32 8, %s21
        %p152 = scmp.lt.s32.totalorder %s151, 7
        %s153 = scalar_select %p152, %s151, 7
        %s154 = smul.addr %s153, 8
        %s155 = scalar_lea.vmem %s1, %s154
        %p156 = pneg %p75
        %p157 = pneg %p72
        %p158 = pneg %p103
        %p159 = pneg %p100
        %s160 = sand.u32 %s90, 1
        %s161 = scalar_lea.sflag [#allocation4], %s160
        %s162 = sand.u32 %s90, 1
        %s163 = smul.addr %s162, 64
        %s164 = scalar_lea.vmem [#allocation3], %s163
        %p165 = scmp.lt.s32.totalorder %s20, 1
        %s166 = scalar_select %p165, %s20, 1
        %s167 = smul.addr %s166, 8
        %s168 = scalar_lea.vmem %s0, %s167
        %s169 = smul.u32 8, %s21
        %p170 = scmp.lt.s32.totalorder %s169, 7
        %s171 = scalar_select %p170, %s169, 7
        %s172 = smul.addr %s171, 8
        %s173 = scalar_lea.vmem %s1, %s172
        %s174 = smul.u32 8, %s21
        %s175 = smul.u32 8, %s21
        %p176 = scmp.eq.s32.totalorder %s21, 0
        // Predicated region
        $region29: #{tpu_custom_call.1} parent=27 // pred_check
          %p177 = pneg %p176
        $region30: #{tpu_custom_call.1} parent=27 // pred_check_branch
          %179 = sbr.rel (%p177) target = $region32
        $region31: #{tpu_custom_call.1} parent=27 // pred_region
          %v180 = vld [vmem:[%s168] sm:$0x1]
          %vm181 = vcmask 516096
          %182 = vst.msk [vmem:[#allocation2] sm:$0x1] %vm181, %v180
          %v183 = vld [vmem:[%s168 + $0x2] sm:$0x1]
          %184 = vst.msk [vmem:[#allocation2 + $0x1] sm:$0x1] %vm181, %v183
          %v185 = vld [vmem:[%s168 + $0x1] sm:$0x1]
          %186 = vst.msk [vmem:[#allocation2 + $0x2] sm:$0x1] %vm181, %v185
          %v187 = vld [vmem:[%s168 + $0x4] sm:$0x1]
          %188 = vst.msk [vmem:[#allocation2 + $0x3] sm:$0x1] %vm181, %v187
          %v189 = vld [vmem:[%s168 + $0x6] sm:$0x1]
          %190 = vst.msk [vmem:[#allocation2 + $0x4] sm:$0x1] %vm181, %v189
          %v191 = vld [vmem:[%s168 + $0x5] sm:$0x1]
          %192 = vst.msk [vmem:[#allocation2 + $0x5] sm:$0x1] %vm181, %v191
          %v193 = vld [vmem:[%s168] sm:$0x1]
          %195 = vrot.lane.b32.xlu0 %v193, 120
          %v196 = vpop.permute.xlu0 %195
          %198 = vst.msk [vmem:[#allocation2 + $0x6] sm:$0x1] %vm181, %v196
          %v199 = vld [vmem:[%s168 + $0x2] sm:$0x1]
          %201 = vrot.lane.b32.xlu0 %v199, 120
          %v202 = vpop.permute.xlu0 %201
          %204 = vst.msk [vmem:[#allocation2 + $0x7] sm:$0x1] %vm181, %v202
          %v205 = vld [vmem:[%s168 + $0x1] sm:$0x1]
          %207 = vrot.lane.b32.xlu0 %v205, 120
          %v208 = vpop.permute.xlu0 %207
          %210 = vst.msk [vmem:[#allocation2 + $0x8] sm:$0x1] %vm181, %v208
          %211 = vst.msk [vmem:[#allocation2 + $0x9] sm:$0x1] %vm181, 1.0
        $region32: #{tpu_custom_call.1} parent=27 // pred_fallthru
          _
        %v212 = vld [vmem:[%s173] sm:$0xff]
        %v213 = vld [vmem:[%s173 + $0x8] sm:$0xff]
        %v214 = vld [vmem:[%s173 + $0x10] sm:$0xff]
        %v215 = vld [vmem:[%s173 + $0x18] sm:$0xff]
        %v216 = vld [vmem:[%s173 + $0x20] sm:$0xff]
        %v217 = vld [vmem:[%s173 + $0x28] sm:$0xff]
        %v218 = vld [vmem:[%s173 + $0x30] sm:$0xff]
        %v219 = vld [vmem:[%s173 + $0x38] sm:$0xff]
        %v220 = vld [vmem:[#allocation2] sm:$0xff]
        %v221 = vld [vmem:[#allocation2 + $0x8] sm:$0x3]
        %vm222 = vcmask 80896
        %v224 = vsel %vm222, %v212, 0
        %v227 = vsel %vm222, %v213, 0
        %v230 = vsel %vm222, %v214, 0
        %v233 = vsel %vm222, %v215, 0
        %v236 = vsel %vm222, %v216, 0
        %v239 = vsel %vm222, %v217, 0
        %v242 = vsel %vm222, %v218, 0
        %v245 = vsel %vm222, %v219, 0
        %vm247 = vcmask 1041408
        %v249 = vsel %vm247, %v221, 0
        %251 = vmatprep.subr.mxu0 0.0
        %v252 = vand.u32 %v220, 4294901760
        %253 = vmatpush1.msra.mxu0 %v252
        %254 = vmatprep.subr.mxu0 0.0
        %v255 = vand.u32 %v249, 4294901760
        %256 = vmatpush1.msra.mxu0 %v255
        %257 = vmatprep.subr.mxu0 0.0
        %258 = vmatpush1.msra.mxu0 0.0
        %259 = vmatprep.subr.mxu0 0.0
        %260 = vmatpush1.msra.mxu0 0.0
        %261 = vmatprep.subr.mxu0 0.0
        %262 = vmatpush1.msra.mxu0 0.0
        %263 = vmatprep.subr.mxu0 0.0
        %264 = vmatpush1.msra.mxu0 0.0
        %265 = vmatprep.subr.mxu0 0.0
        %266 = vmatpush1.msra.mxu0 0.0
        %267 = vmatprep.subr.mxu0 0.0
        %268 = vmatpush1.msra.mxu0 0.0
        %269 = vmatprep.subr.mxu0 0.0
        %270 = vmatpush1.msra.mxu0 0.0
        %271 = vmatprep.subr.mxu0 0.0
        %272 = vmatpush1.msra.mxu0 0.0
        %273 = vmatprep.subr.mxu0 0.0
        %274 = vmatpush1.msra.mxu0 0.0
        %275 = vmatprep.subr.mxu0 0.0
        %276 = vmatpush1.msra.mxu0 0.0
        %277 = vmatprep.subr.mxu0 0.0
        %278 = vmatpush1.msra.mxu0 0.0
        %279 = vmatprep.subr.mxu0 0.0
        %280 = vmatpush1.msra.mxu0 0.0
        %281 = vmatprep.subr.mxu0 0.0
        %282 = vmatpush1.msra.mxu0 0.0
        %283 = vmatprep.subr.mxu0 0.0
        %284 = vmatpush1.msra.mxu0 0.0
        %285 = vmatprep.subr.mxu0 0.0
        %286 = vmatpush1.msra.mxu0 0.0
        %287 = vmatprep.subr.mxu0 0.0
        %288 = vmatpush1.msra.mxu0 0.0
        %289 = vmatprep.subr.mxu0 0.0
        %290 = vmatpush1.msra.mxu0 0.0
        %291 = vmatprep.subr.mxu0 0.0
        %292 = vmatpush1.msra.mxu0 0.0
        %293 = vmatprep.subr.mxu0 0.0
        %294 = vmatpush1.msra.mxu0 0.0
        %295 = vmatprep.subr.mxu0 0.0
        %296 = vmatpush1.msra.mxu0 0.0
        %297 = vmatprep.subr.mxu0 0.0
        %298 = vmatpush1.msra.mxu0 0.0
        %299 = vmatprep.subr.mxu0 0.0
        %300 = vmatpush1.msra.mxu0 0.0
        %301 = vmatprep.subr.mxu0 0.0
        %302 = vmatpush1.msra.mxu0 0.0
        %303 = vmatprep.subr.mxu0 0.0
        %304 = vmatpush1.msra.mxu0 0.0
        %305 = vmatprep.subr.mxu0 0.0
        %306 = vmatpush1.msra.mxu0 0.0
        %307 = vmatprep.subr.mxu0 0.0
        %308 = vmatpush1.msra.mxu0 0.0
        %309 = vmatprep.subr.mxu0 0.0
        %310 = vmatpush1.msra.mxu0 0.0
        %311 = vmatprep.subr.mxu0 0.0
        %312 = vmatpush1.msra.mxu0 0.0
        %313 = vmatprep.subr.mxu0 0.0
        %314 = vmatpush1.msra.mxu0 0.0
        %315 = vmatprep.subr.mxu0 0.0
        %316 = vmatpush1.msra.mxu0 0.0
        %317 = vmatprep.mubr.f32.mxu0 0.0
        %v318 = vand.u32 %v224, 4294901760
        %v319 = vsub.f32 %v224, %v318
        %v320 = vand.u32 %v319, 4294901760
        %v321 = vsub.f32 %v319, %v320
        %v322 = vand.u32 %v321, 4294901760
        %323 = vmatmul.mubr.f32.gmra.mrb[0].mxu0 %v322
        %v324 = vpop.f32.mrb[0].mxu0
        %v325 = vadd.f32 0.0, %v324
        %v326 = vpop.f32.mrb[0].mxu0
        %327 = vmatprep.mubr.f32.mxu0 0.0
        %v328 = vand.u32 %v227, 4294901760
        %v329 = vsub.f32 %v227, %v328
        %v330 = vand.u32 %v329, 4294901760
        %v331 = vsub.f32 %v329, %v330
        %v332 = vand.u32 %v331, 4294901760
        %333 = vmatmul.mubr.f32.gmra.mrb[0].mxu0 %v332
        %v334 = vpop.f32.mrb[0].mxu0
        %v335 = vadd.f32 0.0, %v334
        %v336 = vpop.f32.mrb[0].mxu0
        %337 = vmatprep.mubr.f32.mxu0 0.0
        %v338 = vand.u32 %v230, 4294901760
        %v339 = vsub.f32 %v230, %v338
        %v340 = vand.u32 %v339, 4294901760
        %v341 = vsub.f32 %v339, %v340
        %v342 = vand.u32 %v341, 4294901760
        %343 = vmatmul.mubr.f32.gmra.mrb[0].mxu0 %v342
        %v344 = vpop.f32.mrb[0].mxu0
        %v345 = vadd.f32 0.0, %v344
        %v346 = vpop.f32.mrb[0].mxu0
        %347 = vmatprep.mubr.f32.mxu0 0.0
        %v348 = vand.u32 %v233, 4294901760
        %v349 = vsub.f32 %v233, %v348
        %v350 = vand.u32 %v349, 4294901760
        %v351 = vsub.f32 %v349, %v350
        %v352 = vand.u32 %v351, 4294901760
        %353 = vmatmul.mubr.f32.gmra.mrb[0].mxu0 %v352
        %v354 = vpop.f32.mrb[0].mxu0
        %v355 = vadd.f32 0.0, %v354
        %v356 = vpop.f32.mrb[0].mxu0
        %357 = vmatprep.mubr.f32.mxu0 0.0
        %v358 = vand.u32 %v236, 4294901760
        %v359 = vsub.f32 %v236, %v358
        %v360 = vand.u32 %v359, 4294901760
        %v361 = vsub.f32 %v359, %v360
        %v362 = vand.u32 %v361, 4294901760
        %363 = vmatmul.mubr.f32.gmra.mrb[0].mxu0 %v362
        %v364 = vpop.f32.mrb[0].mxu0
        %v365 = vadd.f32 0.0, %v364
        %v366 = vpop.f32.mrb[0].mxu0
        %367 = vmatprep.mubr.f32.mxu0 0.0
        %v368 = vand.u32 %v239, 4294901760
        %v369 = vsub.f32 %v239, %v368
        %v370 = vand.u32 %v369, 4294901760
        %v371 = vsub.f32 %v369, %v370
        %v372 = vand.u32 %v371, 4294901760
        %373 = vmatmul.mubr.f32.gmra.mrb[0].mxu0 %v372
        %v374 = vpop.f32.mrb[0].mxu0
        %v375 = vadd.f32 0.0, %v374
        %v376 = vpop.f32.mrb[0].mxu0
        %377 = vmatprep.mubr.f32.mxu0 0.0
        %v378 = vand.u32 %v242, 4294901760
        %v379 = vsub.f32 %v242, %v378
        %v380 = vand.u32 %v379, 4294901760
        %v381 = vsub.f32 %v379, %v380
        %v382 = vand.u32 %v381, 4294901760
        %383 = vmatmul.mubr.f32.gmra.mrb[0].mxu0 %v382
        %v384 = vpop.f32.mrb[0].mxu0
        %v385 = vadd.f32 0.0, %v384
        %v386 = vpop.f32.mrb[0].mxu0
        %387 = vmatprep.mubr.f32.mxu0 0.0
        %v388 = vand.u32 %v245, 4294901760
        %v389 = vsub.f32 %v245, %v388
        %v390 = vand.u32 %v389, 4294901760
        %v391 = vsub.f32 %v389, %v390
        %v392 = vand.u32 %v391, 4294901760
        %393 = vmatmul.mubr.f32.gmra.mrb[0].mxu0 %v392
        %v394 = vpop.f32.mrb[0].mxu0
        %v395 = vadd.f32 0.0, %v394
        %v396 = vpop.f32.mrb[0].mxu0
        %397 = vdwg.mxu0
        %398 = vmatprep.subr.mxu0 0.0
        %v399 = vand.u32 %v220, 4294901760
        %v400 = vsub.f32 %v220, %v399
        %v401 = vand.u32 %v400, 4294901760
        %v402 = vsub.f32 %v400, %v401
        %v403 = vand.u32 %v402, 4294901760
        %404 = vmatpush1.msra.mxu0 %v403
        %405 = vmatprep.subr.mxu0 0.0
        %v406 = vand.u32 %v249, 4294901760
        %v407 = vsub.f32 %v249, %v406
        %v408 = vand.u32 %v407, 4294901760
        %v409 = vsub.f32 %v407, %v408
        %v410 = vand.u32 %v409, 4294901760
        %411 = vmatpush1.msra.mxu0 %v410
        %412 = vmatprep.subr.mxu0 0.0
        %413 = vmatpush1.msra.mxu0 0.0
        %414 = vmatprep.subr.mxu0 0.0
        %415 = vmatpush1.msra.mxu0 0.0
        %416 = vmatprep.subr.mxu0 0.0
        %417 = vmatpush1.msra.mxu0 0.0
        %418 = vmatprep.subr.mxu0 0.0
        %419 = vmatpush1.msra.mxu0 0.0
        %420 = vmatprep.subr.mxu0 0.0
        %421 = vmatpush1.msra.mxu0 0.0
        %422 = vmatprep.subr.mxu0 0.0
        %423 = vmatpush1.msra.mxu0 0.0
        %424 = vmatprep.subr.mxu0 0.0
        %425 = vmatpush1.msra.mxu0 0.0
        %426 = vmatprep.subr.mxu0 0.0
        %427 = vmatpush1.msra.mxu0 0.0
        %428 = vmatprep.subr.mxu0 0.0
        %429 = vmatpush1.msra.mxu0 0.0
        %430 = vmatprep.subr.mxu0 0.0
        %431 = vmatpush1.msra.mxu0 0.0
        %432 = vmatprep.subr.mxu0 0.0
        %433 = vmatpush1.msra.mxu0 0.0
        %434 = vmatprep.subr.mxu0 0.0
        %435 = vmatpush1.msra.mxu0 0.0
        %436 = vmatprep.subr.mxu0 0.0
        %437 = vmatpush1.msra.mxu0 0.0
        %438 = vmatprep.subr.mxu0 0.0
        %439 = vmatpush1.msra.mxu0 0.0
        %440 = vmatprep.subr.mxu0 0.0
        %441 = vmatpush1.msra.mxu0 0.0
        %442 = vmatprep.subr.mxu0 0.0
        %443 = vmatpush1.msra.mxu0 0.0
        %444 = vmatprep.subr.mxu0 0.0
        %445 = vmatpush1.msra.mxu0 0.0
        %446 = vmatprep.subr.mxu0 0.0
        %447 = vmatpush1.msra.mxu0 0.0
        %448 = vmatprep.subr.mxu0 0.0
        %449 = vmatpush1.msra.mxu0 0.0
        %450 = vmatprep.subr.mxu0 0.0
        %451 = vmatpush1.msra.mxu0 0.0
        %452 = vmatprep.subr.mxu0 0.0
        %453 = vmatpush1.msra.mxu0 0.0
        %454 = vmatprep.subr.mxu0 0.0
        %455 = vmatpush1.msra.mxu0 0.0
        %456 = vmatprep.subr.mxu0 0.0
        %457 = vmatpush1.msra.mxu0 0.0
        %458 = vmatprep.subr.mxu0 0.0
        %459 = vmatpush1.msra.mxu0 0.0
        %460 = vmatprep.subr.mxu0 0.0
        %461 = vmatpush1.msra.mxu0 0.0
        %462 = vmatprep.subr.mxu0 0.0
        %463 = vmatpush1.msra.mxu0 0.0
        %464 = vmatprep.subr.mxu0 0.0
        %465 = vmatpush1.msra.mxu0 0.0
        %466 = vmatprep.subr.mxu0 0.0
        %467 = vmatpush1.msra.mxu0 0.0
        %468 = vmatprep.subr.mxu0 0.0
        %469 = vmatpush1.msra.mxu0 0.0
        %470 = vmatprep.subr.mxu0 0.0
        %471 = vmatpush1.msra.mxu0 0.0
        %472 = vmatprep.mubr.f32.mxu0 0.0
        %v473 = vand.u32 %v224, 4294901760
        %474 = vmatmul.mubr.f32.gmra.mrb[0].mxu0 %v473
        %v475 = vpop.f32.mrb[0].mxu0
        %v476 = vadd.f32 %v325, %v475
        %v477 = vpop.f32.mrb[0].mxu0
        %478 = vmatprep.mubr.f32.mxu0 0.0
        %v479 = vand.u32 %v227, 4294901760
        %480 = vmatmul.mubr.f32.gmra.mrb[0].mxu0 %v479
        %v481 = vpop.f32.mrb[0].mxu0
        %v482 = vadd.f32 %v335, %v481
        %v483 = vpop.f32.mrb[0].mxu0
        %484 = vmatprep.mubr.f32.mxu0 0.0
        %v485 = vand.u32 %v230, 4294901760
        %486 = vmatmul.mubr.f32.gmra.mrb[0].mxu0 %v485
        %v487 = vpop.f32.mrb[0].mxu0
        %v488 = vadd.f32 %v345, %v487
        %v489 = vpop.f32.mrb[0].mxu0
        %490 = vmatprep.mubr.f32.mxu0 0.0
        %v491 = vand.u32 %v233, 4294901760
        %492 = vmatmul.mubr.f32.gmra.mrb[0].mxu0 %v491
        %v493 = vpop.f32.mrb[0].mxu0
        %v494 = vadd.f32 %v355, %v493
        %v495 = vpop.f32.mrb[0].mxu0
        %496 = vmatprep.mubr.f32.mxu0 0.0
        %v497 = vand.u32 %v236, 4294901760
        %498 = vmatmul.mubr.f32.gmra.mrb[0].mxu0 %v497
        %v499 = vpop.f32.mrb[0].mxu0
        %v500 = vadd.f32 %v365, %v499
        %v501 = vpop.f32.mrb[0].mxu0
        %502 = vmatprep.mubr.f32.mxu0 0.0
        %v503 = vand.u32 %v239, 4294901760
        %504 = vmatmul.mubr.f32.gmra.mrb[0].mxu0 %v503
        %v505 = vpop.f32.mrb[0].mxu0
        %v506 = vadd.f32 %v375, %v505
        %v507 = vpop.f32.mrb[0].mxu0
        %508 = vmatprep.mubr.f32.mxu0 0.0
        %v509 = vand.u32 %v242, 4294901760
        %510 = vmatmul.mubr.f32.gmra.mrb[0].mxu0 %v509
        %v511 = vpop.f32.mrb[0].mxu0
        %v512 = vadd.f32 %v385, %v511
        %v513 = vpop.f32.mrb[0].mxu0
        %514 = vmatprep.mubr.f32.mxu0 0.0
        %v515 = vand.u32 %v245, 4294901760
        %516 = vmatmul.mubr.f32.gmra.mrb[0].mxu0 %v515
        %v517 = vpop.f32.mrb[0].mxu0
        %v518 = vadd.f32 %v395, %v517
        %v519 = vpop.f32.mrb[0].mxu0
        %520 = vdwg.mxu0
        %521 = vmatprep.subr.mxu0 0.0
        %v522 = vand.u32 %v220, 4294901760
        %v523 = vsub.f32 %v220, %v522
        %524 = vmatpush1.msra.mxu0 %v523
        %525 = vmatprep.subr.mxu0 0.0
        %v526 = vand.u32 %v249, 4294901760
        %v527 = vsub.f32 %v249, %v526
        %528 = vmatpush1.msra.mxu0 %v527
        %529 = vmatprep.subr.mxu0 0.0
        %530 = vmatpush1.msra.mxu0 0.0
        %531 = vmatprep.subr.mxu0 0.0
        %532 = vmatpush1.msra.mxu0 0.0
        %533 = vmatprep.subr.mxu0 0.0
        %534 = vmatpush1.msra.mxu0 0.0
        %535 = vmatprep.subr.mxu0 0.0
        %536 = vmatpush1.msra.mxu0 0.0
        %537 = vmatprep.subr.mxu0 0.0
        %538 = vmatpush1.msra.mxu0 0.0
        %539 = vmatprep.subr.mxu0 0.0
        %540 = vmatpush1.msra.mxu0 0.0
        %541 = vmatprep.subr.mxu0 0.0
        %542 = vmatpush1.msra.mxu0 0.0
        %543 = vmatprep.subr.mxu0 0.0
        %544 = vmatpush1.msra.mxu0 0.0
        %545 = vmatprep.subr.mxu0 0.0
        %546 = vmatpush1.msra.mxu0 0.0
        %547 = vmatprep.subr.mxu0 0.0
        %548 = vmatpush1.msra.mxu0 0.0
        %549 = vmatprep.subr.mxu0 0.0
        %550 = vmatpush1.msra.mxu0 0.0
        %551 = vmatprep.subr.mxu0 0.0
        %552 = vmatpush1.msra.mxu0 0.0
        %553 = vmatprep.subr.mxu0 0.0
        %554 = vmatpush1.msra.mxu0 0.0
        %555 = vmatprep.subr.mxu0 0.0
        %556 = vmatpush1.msra.mxu0 0.0
        %557 = vmatprep.subr.mxu0 0.0
        %558 = vmatpush1.msra.mxu0 0.0
        %559 = vmatprep.subr.mxu0 0.0
        %560 = vmatpush1.msra.mxu0 0.0
        %561 = vmatprep.subr.mxu0 0.0
        %562 = vmatpush1.msra.mxu0 0.0
        %563 = vmatprep.subr.mxu0 0.0
        %564 = vmatpush1.msra.mxu0 0.0
        %565 = vmatprep.subr.mxu0 0.0
        %566 = vmatpush1.msra.mxu0 0.0
        %567 = vmatprep.subr.mxu0 0.0
        %568 = vmatpush1.msra.mxu0 0.0
        %569 = vmatprep.subr.mxu0 0.0
        %570 = vmatpush1.msra.mxu0 0.0
        %571 = vmatprep.subr.mxu0 0.0
        %572 = vmatpush1.msra.mxu0 0.0
        %573 = vmatprep.subr.mxu0 0.0
        %574 = vmatpush1.msra.mxu0 0.0
        %575 = vmatprep.subr.mxu0 0.0
        %576 = vmatpush1.msra.mxu0 0.0
        %577 = vmatprep.subr.mxu0 0.0
        %578 = vmatpush1.msra.mxu0 0.0
        %579 = vmatprep.subr.mxu0 0.0
        %580 = vmatpush1.msra.mxu0 0.0
        %581 = vmatprep.subr.mxu0 0.0
        %582 = vmatpush1.msra.mxu0 0.0
        %583 = vmatprep.subr.mxu0 0.0
        %584 = vmatpush1.msra.mxu0 0.0
        %585 = vmatprep.subr.mxu0 0.0
        %586 = vmatpush1.msra.mxu0 0.0
        %587 = vmatprep.subr.mxu0 0.0
        %588 = vmatpush1.msra.mxu0 0.0
        %589 = vmatprep.mubr.f32.mxu0 0.0
        %v590 = vand.u32 %v224, 4294901760
        %v591 = vsub.f32 %v224, %v590
        %592 = vmatmul.mubr.f32.gmra.mrb[0].mxu0 %v591
        %v593 = vpop.f32.mrb[0].mxu0
        %v594 = vadd.f32 %v476, %v593
        %v595 = vpop.f32.mrb[0].mxu0
        %596 = vmatprep.mubr.f32.mxu0 0.0
        %v597 = vand.u32 %v227, 4294901760
        %v598 = vsub.f32 %v227, %v597
        %599 = vmatmul.mubr.f32.gmra.mrb[0].mxu0 %v598
        %v600 = vpop.f32.mrb[0].mxu0
        %v601 = vadd.f32 %v482, %v600
        %v602 = vpop.f32.mrb[0].mxu0
        %603 = vmatprep.mubr.f32.mxu0 0.0
        %v604 = vand.u32 %v230, 4294901760
        %v605 = vsub.f32 %v230, %v604
        %606 = vmatmul.mubr.f32.gmra.mrb[0].mxu0 %v605
        %v607 = vpop.f32.mrb[0].mxu0
        %v608 = vadd.f32 %v488, %v607
        %v609 = vpop.f32.mrb[0].mxu0
        %610 = vmatprep.mubr.f32.mxu0 0.0
        %v611 = vand.u32 %v233, 4294901760
        %v612 = vsub.f32 %v233, %v611
        %613 = vmatmul.mubr.f32.gmra.mrb[0].mxu0 %v612
        %v614 = vpop.f32.mrb[0].mxu0
        %v615 = vadd.f32 %v494, %v614
        %v616 = vpop.f32.mrb[0].mxu0
        %617 = vmatprep.mubr.f32.mxu0 0.0
        %v618 = vand.u32 %v236, 4294901760
        %v619 = vsub.f32 %v236, %v618
        %620 = vmatmul.mubr.f32.gmra.mrb[0].mxu0 %v619
        %v621 = vpop.f32.mrb[0].mxu0
        %v622 = vadd.f32 %v500, %v621
        %v623 = vpop.f32.mrb[0].mxu0
        %624 = vmatprep.mubr.f32.mxu0 0.0
        %v625 = vand.u32 %v239, 4294901760
        %v626 = vsub.f32 %v239, %v625
        %627 = vmatmul.mubr.f32.gmra.mrb[0].mxu0 %v626
        %v628 = vpop.f32.mrb[0].mxu0
        %v629 = vadd.f32 %v506, %v628
        %v630 = vpop.f32.mrb[0].mxu0
        %631 = vmatprep.mubr.f32.mxu0 0.0
        %v632 = vand.u32 %v242, 4294901760
        %v633 = vsub.f32 %v242, %v632
        %634 = vmatmul.mubr.f32.gmra.mrb[0].mxu0 %v633
        %v635 = vpop.f32.mrb[0].mxu0
        %v636 = vadd.f32 %v512, %v635
        %v637 = vpop.f32.mrb[0].mxu0
        %638 = vmatprep.mubr.f32.mxu0 0.0
        %v639 = vand.u32 %v245, 4294901760
        %v640 = vsub.f32 %v245, %v639
        %641 = vmatmul.mubr.f32.gmra.mrb[0].mxu0 %v640
        %v642 = vpop.f32.mrb[0].mxu0
        %v643 = vadd.f32 %v518, %v642
        %v644 = vpop.f32.mrb[0].mxu0
        %645 = vdwg.mxu0
        %646 = vmatprep.subr.mxu0 0.0
        %v647 = vand.u32 %v220, 4294901760
        %648 = vmatpush1.msra.mxu0 %v647
        %649 = vmatprep.subr.mxu0 0.0
        %v650 = vand.u32 %v249, 4294901760
        %651 = vmatpush1.msra.mxu0 %v650
        %652 = vmatprep.subr.mxu0 0.0
        %653 = vmatpush1.msra.mxu0 0.0
        %654 = vmatprep.subr.mxu0 0.0
        %655 = vmatpush1.msra.mxu0 0.0
        %656 = vmatprep.subr.mxu0 0.0
        %657 = vmatpush1.msra.mxu0 0.0
        %658 = vmatprep.subr.mxu0 0.0
        %659 = vmatpush1.msra.mxu0 0.0
        %660 = vmatprep.subr.mxu0 0.0
        %661 = vmatpush1.msra.mxu0 0.0
        %662 = vmatprep.subr.mxu0 0.0
        %663 = vmatpush1.msra.mxu0 0.0
        %664 = vmatprep.subr.mxu0 0.0
        %665 = vmatpush1.msra.mxu0 0.0
        %666 = vmatprep.subr.mxu0 0.0
        %667 = vmatpush1.msra.mxu0 0.0
        %668 = vmatprep.subr.mxu0 0.0
        %669 = vmatpush1.msra.mxu0 0.0
        %670 = vmatprep.subr.mxu0 0.0
        %671 = vmatpush1.msra.mxu0 0.0
        %672 = vmatprep.subr.mxu0 0.0
        %673 = vmatpush1.msra.mxu0 0.0
        %674 = vmatprep.subr.mxu0 0.0
        %675 = vmatpush1.msra.mxu0 0.0
        %676 = vmatprep.subr.mxu0 0.0
        %677 = vmatpush1.msra.mxu0 0.0
        %678 = vmatprep.subr.mxu0 0.0
        %679 = vmatpush1.msra.mxu0 0.0
        %680 = vmatprep.subr.mxu0 0.0
        %681 = vmatpush1.msra.mxu0 0.0
        %682 = vmatprep.subr.mxu0 0.0
        %683 = vmatpush1.msra.mxu0 0.0
        %684 = vmatprep.subr.mxu0 0.0
        %685 = vmatpush1.msra.mxu0 0.0
        %686 = vmatprep.subr.mxu0 0.0
        %687 = vmatpush1.msra.mxu0 0.0
        %688 = vmatprep.subr.mxu0 0.0
        %689 = vmatpush1.msra.mxu0 0.0
        %690 = vmatprep.subr.mxu0 0.0
        %691 = vmatpush1.msra.mxu0 0.0
        %692 = vmatprep.subr.mxu0 0.0
        %693 = vmatpush1.msra.mxu0 0.0
        %694 = vmatprep.subr.mxu0 0.0
        %695 = vmatpush1.msra.mxu0 0.0
        %696 = vmatprep.subr.mxu0 0.0
        %697 = vmatpush1.msra.mxu0 0.0
        %698 = vmatprep.subr.mxu0 0.0
        %699 = vmatpush1.msra.mxu0 0.0
        %700 = vmatprep.subr.mxu0 0.0
        %701 = vmatpush1.msra.mxu0 0.0
        %702 = vmatprep.subr.mxu0 0.0
        %703 = vmatpush1.msra.mxu0 0.0
        %704 = vmatprep.subr.mxu0 0.0
        %705 = vmatpush1.msra.mxu0 0.0
        %706 = vmatprep.subr.mxu0 0.0
        %707 = vmatpush1.msra.mxu0 0.0
        %708 = vmatprep.subr.mxu0 0.0
        %709 = vmatpush1.msra.mxu0 0.0
        %710 = vmatprep.subr.mxu0 0.0
        %711 = vmatpush1.msra.mxu0 0.0
        %712 = vmatprep.mubr.f32.mxu0 0.0
        %v713 = vand.u32 %v224, 4294901760
        %v714 = vsub.f32 %v224, %v713
        %v715 = vand.u32 %v714, 4294901760
        %716 = vmatmul.mubr.f32.gmra.mrb[0].mxu0 %v715
        %v717 = vpop.f32.mrb[0].mxu0
        %v718 = vadd.f32 %v594, %v717
        %v719 = vpop.f32.mrb[0].mxu0
        %720 = vmatprep.mubr.f32.mxu0 0.0
        %v721 = vand.u32 %v227, 4294901760
        %v722 = vsub.f32 %v227, %v721
        %v723 = vand.u32 %v722, 4294901760
        %724 = vmatmul.mubr.f32.gmra.mrb[0].mxu0 %v723
        %v725 = vpop.f32.mrb[0].mxu0
        %v726 = vadd.f32 %v601, %v725
        %v727 = vpop.f32.mrb[0].mxu0
        %728 = vmatprep.mubr.f32.mxu0 0.0
        %v729 = vand.u32 %v230, 4294901760
        %v730 = vsub.f32 %v230, %v729
        %v731 = vand.u32 %v730, 4294901760
        %732 = vmatmul.mubr.f32.gmra.mrb[0].mxu0 %v731
        %v733 = vpop.f32.mrb[0].mxu0
        %v734 = vadd.f32 %v608, %v733
        %v735 = vpop.f32.mrb[0].mxu0
        %736 = vmatprep.mubr.f32.mxu0 0.0
        %v737 = vand.u32 %v233, 4294901760
        %v738 = vsub.f32 %v233, %v737
        %v739 = vand.u32 %v738, 4294901760
        %740 = vmatmul.mubr.f32.gmra.mrb[0].mxu0 %v739
        %v741 = vpop.f32.mrb[0].mxu0
        %v742 = vadd.f32 %v615, %v741
        %v743 = vpop.f32.mrb[0].mxu0
        %744 = vmatprep.mubr.f32.mxu0 0.0
        %v745 = vand.u32 %v236, 4294901760
        %v746 = vsub.f32 %v236, %v745
        %v747 = vand.u32 %v746, 4294901760
        %748 = vmatmul.mubr.f32.gmra.mrb[0].mxu0 %v747
        %v749 = vpop.f32.mrb[0].mxu0
        %v750 = vadd.f32 %v622, %v749
        %v751 = vpop.f32.mrb[0].mxu0
        %752 = vmatprep.mubr.f32.mxu0 0.0
        %v753 = vand.u32 %v239, 4294901760
        %v754 = vsub.f32 %v239, %v753
        %v755 = vand.u32 %v754, 4294901760
        %756 = vmatmul.mubr.f32.gmra.mrb[0].mxu0 %v755
        %v757 = vpop.f32.mrb[0].mxu0
        %v758 = vadd.f32 %v629, %v757
        %v759 = vpop.f32.mrb[0].mxu0
        %760 = vmatprep.mubr.f32.mxu0 0.0
        %v761 = vand.u32 %v242, 4294901760
        %v762 = vsub.f32 %v242, %v761
        %v763 = vand.u32 %v762, 4294901760
        %764 = vmatmul.mubr.f32.gmra.mrb[0].mxu0 %v763
        %v765 = vpop.f32.mrb[0].mxu0
        %v766 = vadd.f32 %v636, %v765
        %v767 = vpop.f32.mrb[0].mxu0
        %768 = vmatprep.mubr.f32.mxu0 0.0
        %v769 = vand.u32 %v245, 4294901760
        %v770 = vsub.f32 %v245, %v769
        %v771 = vand.u32 %v770, 4294901760
        %772 = vmatmul.mubr.f32.gmra.mrb[0].mxu0 %v771
        %v773 = vpop.f32.mrb[0].mxu0
        %v774 = vadd.f32 %v643, %v773
        %v775 = vpop.f32.mrb[0].mxu0
        %776 = vdwg.mxu0
        %777 = vmatprep.subr.mxu0 0.0
        %v778 = vand.u32 %v220, 4294901760
        %v779 = vsub.f32 %v220, %v778
        %v780 = vand.u32 %v779, 4294901760
        %781 = vmatpush1.msra.mxu0 %v780
        %782 = vmatprep.subr.mxu0 0.0
        %v783 = vand.u32 %v249, 4294901760
        %v784 = vsub.f32 %v249, %v783
        %v785 = vand.u32 %v784, 4294901760
        %786 = vmatpush1.msra.mxu0 %v785
        %787 = vmatprep.subr.mxu0 0.0
        %788 = vmatpush1.msra.mxu0 0.0
        %789 = vmatprep.subr.mxu0 0.0
        %790 = vmatpush1.msra.mxu0 0.0
        %791 = vmatprep.subr.mxu0 0.0
        %792 = vmatpush1.msra.mxu0 0.0
        %793 = vmatprep.subr.mxu0 0.0
        %794 = vmatpush1.msra.mxu0 0.0
        %795 = vmatprep.subr.mxu0 0.0
        %796 = vmatpush1.msra.mxu0 0.0
        %797 = vmatprep.subr.mxu0 0.0
        %798 = vmatpush1.msra.mxu0 0.0
        %799 = vmatprep.subr.mxu0 0.0
        %800 = vmatpush1.msra.mxu0 0.0
        %801 = vmatprep.subr.mxu0 0.0
        %802 = vmatpush1.msra.mxu0 0.0
        %803 = vmatprep.subr.mxu0 0.0
        %804 = vmatpush1.msra.mxu0 0.0
        %805 = vmatprep.subr.mxu0 0.0
        %806 = vmatpush1.msra.mxu0 0.0
        %807 = vmatprep.subr.mxu0 0.0
        %808 = vmatpush1.msra.mxu0 0.0
        %809 = vmatprep.subr.mxu0 0.0
        %810 = vmatpush1.msra.mxu0 0.0
        %811 = vmatprep.subr.mxu0 0.0
        %812 = vmatpush1.msra.mxu0 0.0
        %813 = vmatprep.subr.mxu0 0.0
        %814 = vmatpush1.msra.mxu0 0.0
        %815 = vmatprep.subr.mxu0 0.0
        %816 = vmatpush1.msra.mxu0 0.0
        %817 = vmatprep.subr.mxu0 0.0
        %818 = vmatpush1.msra.mxu0 0.0
        %819 = vmatprep.subr.mxu0 0.0
        %820 = vmatpush1.msra.mxu0 0.0
        %821 = vmatprep.subr.mxu0 0.0
        %822 = vmatpush1.msra.mxu0 0.0
        %823 = vmatprep.subr.mxu0 0.0
        %824 = vmatpush1.msra.mxu0 0.0
        %825 = vmatprep.subr.mxu0 0.0
        %826 = vmatpush1.msra.mxu0 0.0
        %827 = vmatprep.subr.mxu0 0.0
        %828 = vmatpush1.msra.mxu0 0.0
        %829 = vmatprep.subr.mxu0 0.0
        %830 = vmatpush1.msra.mxu0 0.0
        %831 = vmatprep.subr.mxu0 0.0
        %832 = vmatpush1.msra.mxu0 0.0
        %833 = vmatprep.subr.mxu0 0.0
        %834 = vmatpush1.msra.mxu0 0.0
        %835 = vmatprep.subr.mxu0 0.0
        %836 = vmatpush1.msra.mxu0 0.0
        %837 = vmatprep.subr.mxu0 0.0
        %838 = vmatpush1.msra.mxu0 0.0
        %839 = vmatprep.subr.mxu0 0.0
        %840 = vmatpush1.msra.mxu0 0.0
        %841 = vmatprep.subr.mxu0 0.0
        %842 = vmatpush1.msra.mxu0 0.0
        %843 = vmatprep.subr.mxu0 0.0
        %844 = vmatpush1.msra.mxu0 0.0
        %845 = vmatprep.subr.mxu0 0.0
        %846 = vmatpush1.msra.mxu0 0.0
        %847 = vmatprep.mubr.f32.mxu0 0.0
        %v848 = vand.u32 %v224, 4294901760
        %849 = vmatmul.mubr.f32.gmra.mrb[0].mxu0 %v848
        %v850 = vpop.f32.mrb[0].mxu0
        %v851 = vadd.f32 %v718, %v850
        %v852 = vpop.f32.mrb[0].mxu0
        %853 = vmatprep.mubr.f32.mxu0 0.0
        %v854 = vand.u32 %v227, 4294901760
        %855 = vmatmul.mubr.f32.gmra.mrb[0].mxu0 %v854
        %v856 = vpop.f32.mrb[0].mxu0
        %v857 = vadd.f32 %v726, %v856
        %v858 = vpop.f32.mrb[0].mxu0
        %859 = vmatprep.mubr.f32.mxu0 0.0
        %v860 = vand.u32 %v230, 4294901760
        %861 = vmatmul.mubr.f32.gmra.mrb[0].mxu0 %v860
        %v862 = vpop.f32.mrb[0].mxu0
        %v863 = vadd.f32 %v734, %v862
        %v864 = vpop.f32.mrb[0].mxu0
        %865 = vmatprep.mubr.f32.mxu0 0.0
        %v866 = vand.u32 %v233, 4294901760
        %867 = vmatmul.mubr.f32.gmra.mrb[0].mxu0 %v866
        %v868 = vpop.f32.mrb[0].mxu0
        %v869 = vadd.f32 %v742, %v868
        %v870 = vpop.f32.mrb[0].mxu0
        %871 = vmatprep.mubr.f32.mxu0 0.0
        %v872 = vand.u32 %v236, 4294901760
        %873 = vmatmul.mubr.f32.gmra.mrb[0].mxu0 %v872
        %v874 = vpop.f32.mrb[0].mxu0
        %v875 = vadd.f32 %v750, %v874
        %v876 = vpop.f32.mrb[0].mxu0
        %877 = vmatprep.mubr.f32.mxu0 0.0
        %v878 = vand.u32 %v239, 4294901760
        %879 = vmatmul.mubr.f32.gmra.mrb[0].mxu0 %v878
        %v880 = vpop.f32.mrb[0].mxu0
        %v881 = vadd.f32 %v758, %v880
        %v882 = vpop.f32.mrb[0].mxu0
        %883 = vmatprep.mubr.f32.mxu0 0.0
        %v884 = vand.u32 %v242, 4294901760
        %885 = vmatmul.mubr.f32.gmra.mrb[0].mxu0 %v884
        %v886 = vpop.f32.mrb[0].mxu0
        %v887 = vadd.f32 %v766, %v886
        %v888 = vpop.f32.mrb[0].mxu0
        %889 = vmatprep.mubr.f32.mxu0 0.0
        %v890 = vand.u32 %v245, 4294901760
        %891 = vmatmul.mubr.f32.gmra.mrb[0].mxu0 %v890
        %v892 = vpop.f32.mrb[0].mxu0
        %v893 = vadd.f32 %v774, %v892
        %v894 = vpop.f32.mrb[0].mxu0
        %895 = vdwg.mxu0
        %896 = vmatprep.subr.mxu0 0.0
        %v897 = vand.u32 %v220, 4294901760
        %898 = vmatpush1.msra.mxu0 %v897
        %899 = vmatprep.subr.mxu0 0.0
        %v900 = vand.u32 %v249, 4294901760
        %901 = vmatpush1.msra.mxu0 %v900
        %902 = vmatprep.subr.mxu0 0.0
        %903 = vmatpush1.msra.mxu0 0.0
        %904 = vmatprep.subr.mxu0 0.0
        %905 = vmatpush1.msra.mxu0 0.0
        %906 = vmatprep.subr.mxu0 0.0
        %907 = vmatpush1.msra.mxu0 0.0
        %908 = vmatprep.subr.mxu0 0.0
        %909 = vmatpush1.msra.mxu0 0.0
        %910 = vmatprep.subr.mxu0 0.0
        %911 = vmatpush1.msra.mxu0 0.0
        %912 = vmatprep.subr.mxu0 0.0
        %913 = vmatpush1.msra.mxu0 0.0
        %914 = vmatprep.subr.mxu0 0.0
        %915 = vmatpush1.msra.mxu0 0.0
        %916 = vmatprep.subr.mxu0 0.0
        %917 = vmatpush1.msra.mxu0 0.0
        %918 = vmatprep.subr.mxu0 0.0
        %919 = vmatpush1.msra.mxu0 0.0
        %920 = vmatprep.subr.mxu0 0.0
        %921 = vmatpush1.msra.mxu0 0.0
        %922 = vmatprep.subr.mxu0 0.0
        %923 = vmatpush1.msra.mxu0 0.0
        %924 = vmatprep.subr.mxu0 0.0
        %925 = vmatpush1.msra.mxu0 0.0
        %926 = vmatprep.subr.mxu0 0.0
        %927 = vmatpush1.msra.mxu0 0.0
        %928 = vmatprep.subr.mxu0 0.0
        %929 = vmatpush1.msra.mxu0 0.0
        %930 = vmatprep.subr.mxu0 0.0
        %931 = vmatpush1.msra.mxu0 0.0
        %932 = vmatprep.subr.mxu0 0.0
        %933 = vmatpush1.msra.mxu0 0.0
        %934 = vmatprep.subr.mxu0 0.0
        %935 = vmatpush1.msra.mxu0 0.0
        %936 = vmatprep.subr.mxu0 0.0
        %937 = vmatpush1.msra.mxu0 0.0
        %938 = vmatprep.subr.mxu0 0.0
        %939 = vmatpush1.msra.mxu0 0.0
        %940 = vmatprep.subr.mxu0 0.0
        %941 = vmatpush1.msra.mxu0 0.0
        %942 = vmatprep.subr.mxu0 0.0
        %943 = vmatpush1.msra.mxu0 0.0
        %944 = vmatprep.subr.mxu0 0.0
        %945 = vmatpush1.msra.mxu0 0.0
        %946 = vmatprep.subr.mxu0 0.0
        %947 = vmatpush1.msra.mxu0 0.0
        %948 = vmatprep.subr.mxu0 0.0
        %949 = vmatpush1.msra.mxu0 0.0
        %950 = vmatprep.subr.mxu0 0.0
        %951 = vmatpush1.msra.mxu0 0.0
        %952 = vmatprep.subr.mxu0 0.0
        %953 = vmatpush1.msra.mxu0 0.0
        %954 = vmatprep.subr.mxu0 0.0
        %955 = vmatpush1.msra.mxu0 0.0
        %956 = vmatprep.subr.mxu0 0.0
        %957 = vmatpush1.msra.mxu0 0.0
        %958 = vmatprep.subr.mxu0 0.0
        %959 = vmatpush1.msra.mxu0 0.0
        %960 = vmatprep.subr.mxu0 0.0
        %961 = vmatpush1.msra.mxu0 0.0
        %962 = vmatprep.mubr.f32.mxu0 0.0
        %v963 = vand.u32 %v224, 4294901760
        %964 = vmatmul.mubr.f32.gmra.mrb[0].mxu0 %v963
        %v965 = vpop.f32.mrb[0].mxu0
        %v966 = vadd.f32 %v851, %v965
        %v967 = vpop.f32.mrb[0].mxu0
        %968 = vmatprep.mubr.f32.mxu0 0.0
        %v969 = vand.u32 %v227, 4294901760
        %970 = vmatmul.mubr.f32.gmra.mrb[0].mxu0 %v969
        %v971 = vpop.f32.mrb[0].mxu0
        %v972 = vadd.f32 %v857, %v971
        %v973 = vpop.f32.mrb[0].mxu0
        %974 = vmatprep.mubr.f32.mxu0 0.0
        %v975 = vand.u32 %v230, 4294901760
        %976 = vmatmul.mubr.f32.gmra.mrb[0].mxu0 %v975
        %v977 = vpop.f32.mrb[0].mxu0
        %v978 = vadd.f32 %v863, %v977
        %v979 = vpop.f32.mrb[0].mxu0
        %980 = vmatprep.mubr.f32.mxu0 0.0
        %v981 = vand.u32 %v233, 4294901760
        %982 = vmatmul.mubr.f32.gmra.mrb[0].mxu0 %v981
        %v983 = vpop.f32.mrb[0].mxu0
        %v984 = vadd.f32 %v869, %v983
        %v985 = vpop.f32.mrb[0].mxu0
        %986 = vmatprep.mubr.f32.mxu0 0.0
        %v987 = vand.u32 %v236, 4294901760
        %988 = vmatmul.mubr.f32.gmra.mrb[0].mxu0 %v987
        %v989 = vpop.f32.mrb[0].mxu0
        %v990 = vadd.f32 %v875, %v989
        %v991 = vpop.f32.mrb[0].mxu0
        %992 = vmatprep.mubr.f32.mxu0 0.0
        %v993 = vand.u32 %v239, 4294901760
        %994 = vmatmul.mubr.f32.gmra.mrb[0].mxu0 %v993
        %v995 = vpop.f32.mrb[0].mxu0
        %v996 = vadd.f32 %v881, %v995
        %v997 = vpop.f32.mrb[0].mxu0
        %998 = vmatprep.mubr.f32.mxu0 0.0
        %v999 = vand.u32 %v242, 4294901760
        %1000 = vmatmul.mubr.f32.gmra.mrb[0].mxu0 %v999
        %v1001 = vpop.f32.mrb[0].mxu0
        %v1002 = vadd.f32 %v887, %v1001
        %v1003 = vpop.f32.mrb[0].mxu0
        %1004 = vmatprep.mubr.f32.mxu0 0.0
        %v1005 = vand.u32 %v245, 4294901760
        %1006 = vmatmul.mubr.f32.gmra.mrb[0].mxu0 %v1005
        %v1007 = vpop.f32.mrb[0].mxu0
        %v1008 = vadd.f32 %v893, %v1007
        %v1009 = vpop.f32.mrb[0].mxu0
        %1010 = vdwg.mxu0
        %vm1011 = vcmask 523264
        %1012 = vst.msk [vmem:[%s164] sm:$0xff] %vm1011, %v966
        %1013 = vst.msk [vmem:[%s164 + $0x8] sm:$0xff] %vm1011, %v972
        %1014 = vst.msk [vmem:[%s164 + $0x10] sm:$0xff] %vm1011, %v978
        %1015 = vst.msk [vmem:[%s164 + $0x18] sm:$0xff] %vm1011, %v984
        %1016 = vst.msk [vmem:[%s164 + $0x20] sm:$0xff] %vm1011, %v990
        %1017 = vst.msk [vmem:[%s164 + $0x28] sm:$0xff] %vm1011, %v996
        %1018 = vst.msk [vmem:[%s164 + $0x30] sm:$0xff] %vm1011, %v1002
        %1019 = vst.msk [vmem:[%s164 + $0x38] sm:$0xff] %vm1011, %v1008
        %s1020 = sand.u32 %s90, 1
        %s1021 = scalar_lea.sflag [#allocation4], %s1020
        %s1022 = sand.u32 %s90, 1
        %s1023 = smul.addr %s1022, 64
        %s1024 = scalar_lea.vmem [#allocation3], %s1023
        // Predicated region
        $region33: #{tpu_custom_call.1} parent=27 // pred_check
          %p1025 = pneg %p100
        $region34: #{tpu_custom_call.1} parent=27 // pred_check_branch
          %1027 = sbr.rel (%p1025) target = $region36
        $region35: #{tpu_custom_call.1} parent=27 // pred_region
          %s1028 = smul.u32 8, %s21
          %s1030 = ssub.s32 1024, 1024
          %1031 = vsyncadd %s1021, %s1030
          %s1032 = smul.addr %s20, 8
          %s1033 = sadd.s32 %s1028, %s1032
          %s1034 = smul.addr %s1033, 128
          %s1035 = scalar_lea.hbm %s2, %s1034
          %s1036 = sshll.u32 %s1024, 4
          %s1037 = int_to_ptr.vmem [resolvable:$true] %s1036
          %1042 = dma.vmem_to_hbm [thread:$0]  %s1037, 1024, %s1035, %s1021, 128, 128, 8
        $region36: #{tpu_custom_call.1} parent=27 // pred_fallthru
          _
      $region28: #{tpu_custom_call.1} parent=5 // pred_fallthru
        _
      %p1043 = scmp.le.s32.totalorder 2, %s11
      // Predicated region
      $region37: #{tpu_custom_call.1} parent=5 // pred_check
        %p1044 = pneg %p1043
      $region38: #{tpu_custom_call.1} parent=5 // pred_check_branch
        %1046 = sbr.rel (%p1044) target = $region40
      $region39: #{tpu_custom_call.1} parent=5 // pred_region
        %s1047 = ssub.s32 %s11, 2
        // Predicated region
        $region41: #{tpu_custom_call.1} parent=39 // pred_check
          %p1048 = pneg %p106
        $region42: #{tpu_custom_call.1} parent=39 // pred_check_branch
          %1050 = sbr.rel (%p1048) target = $region44
        $region43: #{tpu_custom_call.1} parent=39 // pred_region
          %s1051 = sand.u32 %s91, 1
          %s1052 = scalar_lea.sflag [#allocation4], %s1051
          %s1053 = sand.u32 %s91, 1
          %s1054 = smul.addr %s1053, 64
          %s1055 = scalar_lea.vmem [#allocation3], %s1054
          %1056 = dma.done %s1052, 1024
        $region44: #{tpu_custom_call.1} parent=39 // pred_fallthru
          _
      $region40: #{tpu_custom_call.1} parent=5 // pred_fallthru
        _
    $region6: #{tpu_custom_call.1} parent=1 // loop_footer
      %s15 = sadd.s32 1, %s11
    $region7: #{tpu_custom_call.1} parent=1 // loop_footer_branch
      %10 = sbr.rel target = $region3
    $region8: #{tpu_custom_call.1} parent=1 // loop_exit
      _
    %1057 = vsyncpa [#allocation4], 1
    %s1058 = scalar_lea.sflag [#allocation4], 1
    %1059 = vsyncpa %s1058, 1

</llo_original>
